<compile_context>
chip_gen: v6e
topology: v6e:2x2x1
jax: 0.10.0
libtpu: 0.0.40
codegen_flags: <defaults>
</compile_context>

<pallas_src>
import functools

import jax
import jax.numpy as jnp
from jax.experimental import pallas as pl
from jax.experimental.pallas import tpu as pltpu


def _round_up(x, m):
    return ((x + m - 1) // m) * m


def _vmem_capacity_bytes():
    """Physical VMEM of the local TPU; falls back to the smallest (v7x)."""
    try:
        return int(pltpu.get_tpu_info().vmem_capacity_bytes)
    except Exception:
        return 64 * 1024 * 1024


def _pick_tile(hidden_pad, k_dims, itemsize, weight_budget_bytes,
               max_tile=None):
    """Largest hidden-dim tile whose double-buffered weight slab fits budget."""
    cands = [t for t in (128, 256, 512, 1024, 2048)
             if t <= hidden_pad and hidden_pad % t == 0]
    if not cands:
        cands = [128]
    if max_tile is not None:
        cands = [t for t in cands if t <= max_tile] or cands[:1]
    best = cands[0]
    for t in cands:  # ascending; keep the largest tile that fits the budget
        if 2 * k_dims * 4 * t * itemsize <= weight_budget_bytes:
            best = t
    return best


def _maybe_buffered_spec(block_shape, index_map, n_bufs):
    """BlockSpec with deeper weight pipelining when requested & supported."""
    if n_bufs > 2 and hasattr(pl, "Buffered"):
        try:
            return pl.BlockSpec(block_shape, index_map,
                                pipeline_mode=pl.Buffered(n_bufs))
        except TypeError:  # older JAX without pipeline_mode kwarg
            pass
    return pl.BlockSpec(block_shape, index_map)


def _lstm_cell_kernel(xh_ref, c_ref, w_ref, b_ref, h_out_ref, c_out_ref):
    """One hidden-dim tile of an LSTMCell step (grid axis 0 = hidden tiles)."""
    tile = c_ref.shape[1]
    # Single fused gate matmul: [x, h] @ W_tile with f32 MXU accumulation.
    gates = jnp.dot(xh_ref[...], w_ref[...],
                    preferred_element_type=jnp.float32) + b_ref[...]
    # Gate slices are 128-lane aligned (tile is always a multiple of 128).
    # sigmoid(x) = 0.5*(1 + tanh(0.5*x)) -> exactly one EUP push per gate.
    i_g = 0.5 * (1.0 + jnp.tanh(0.5 * gates[:, 0 * tile:1 * tile]))
    f_g = 0.5 * (1.0 + jnp.tanh(0.5 * gates[:, 1 * tile:2 * tile]))
    g_g = jnp.tanh(gates[:, 2 * tile:3 * tile])
    o_g = 0.5 * (1.0 + jnp.tanh(0.5 * gates[:, 3 * tile:4 * tile]))
    c_new = f_g * c_ref[...].astype(jnp.float32) + i_g * g_g
    h_out_ref[...] = (o_g * jnp.tanh(c_new)).astype(h_out_ref.dtype)
    c_out_ref[...] = c_new.astype(c_out_ref.dtype)


class LstmCellPallas:
    """Pallas re-implementation of the PyTorch LstmCell module (single step)."""

    def __init__(self, input_dims, hidden_dims, attach_fc=False, key=None,
                 dtype=jnp.float32, matmul_dtype=jnp.bfloat16, max_tile=None):
        self.input_dims = input_dims
        self.hidden_dims = hidden_dims
        self.attach_fc = attach_fc
        self.dtype = dtype
        self.matmul_dtype = matmul_dtype

        H, D = hidden_dims, input_dims
        K = D + H
        Hp = _round_up(H, 128)          # lane-align gate slices & outputs
        self.hidden_pad = Hp

        # Generation-aware VMEM budgeting (v7x: 64 MiB, v5e/v6e: 128 MiB).
        cap = _vmem_capacity_bytes()
        self.vmem_limit_bytes = int(cap * 0.75)
        itemsize = jnp.dtype(matmul_dtype).itemsize
        # Weight buffers get ~45% of physical VMEM; the rest covers the
        # (resident) xh block, cell-state / output blocks and compiler scratch.
        weight_budget = int(cap * 0.45)
        self.tile = _pick_tile(Hp, K, itemsize, weight_budget, max_tile)
        self.n_tiles = Hp // self.tile
        self.weight_bufs = 2
        if (self.n_tiles >= 3
                and 3 * K * 4 * self.tile * itemsize <= weight_budget):
            self.weight_bufs = 3        # deeper pipelining hides DMA latency

        if key is None:
            key = jax.random.PRNGKey(0)
        k = jax.random.split(key, 6)
        bound = 1.0 / (H ** 0.5)
        # PyTorch LSTMCell params: W_ih (4H, D), W_hh (4H, H), b_ih, b_hh (4H,)
        w_ih = jax.random.uniform(k[0], (4 * H, D), jnp.float32, -bound, bound)
        w_hh = jax.random.uniform(k[1], (4 * H, H), jnp.float32, -bound, bound)
        b_ih = jax.random.uniform(k[2], (4 * H,), jnp.float32, -bound, bound)
        b_hh = jax.random.uniform(k[3], (4 * H,), jnp.float32, -bound, bound)

        # Fused gate weight for [x, h] @ W_cat, columns ordered [i | f | g | o].
        self.w_ih_t = jnp.transpose(w_ih).astype(matmul_dtype)   # (D, 4H)
        self.w_hh_t = jnp.transpose(w_hh).astype(matmul_dtype)   # (H, 4H)
        self.bias = (b_ih + b_hh).reshape(1, 4 * H)               # (1, 4H) f32
        w_cat = jnp.concatenate([self.w_ih_t, self.w_hh_t], axis=0)  # (K, 4H)

        # Zero-pad each gate's H columns to Hp, then re-lay out into one
        # contiguous (K, 4*tile) slab per hidden tile (tile-major, gate-minor)
        # so every grid step's weight DMA is a single contiguous HBM block.
        w_g = w_cat.reshape(K, 4, H)
        b_g = self.bias.reshape(4, H)
        if Hp != H:
            w_g = jnp.pad(w_g, ((0, 0), (0, 0), (0, Hp - H)))
            b_g = jnp.pad(b_g, ((0, 0), (0, Hp - H)))
        t, n = self.tile, self.n_tiles
        self.w_blocks = (w_g.reshape(K, 4, n, t)
                         .transpose(2, 0, 1, 3)
                         .reshape(n, K, 4 * t))                    # matmul_dtype
        self.b_blocks = (b_g.reshape(4, n, t)
                         .transpose(1, 0, 2)
                         .reshape(n, 1, 4 * t)).astype(jnp.float32)

        if attach_fc:
            fc_bound = 1.0 / (H ** 0.5)
            self.w_fc = jax.random.uniform(k[4], (1, H), jnp.float32,
                                           -fc_bound, fc_bound)     # (1, H)
            self.b_fc = jax.random.uniform(k[5], (1,), jnp.float32,
                                           -fc_bound, fc_bound).reshape(1, 1)

    @functools.partial(jax.jit, static_argnums=0)
    def __call__(self, x, hidden_state, cell_state):
        B = x.shape[0]
        H, Hp = self.hidden_dims, self.hidden_pad
        K = self.input_dims + H
        tn = self.tile
        n_tiles = self.n_tiles

        # Fused-gate input [x, h] so the kernel does a single MXU matmul.
        xh = jnp.concatenate([x, hidden_state],
                             axis=-1).astype(self.matmul_dtype)
        c_in = cell_state.astype(jnp.float32)
        if Hp != H:
            c_in = jnp.pad(c_in, ((0, 0), (0, Hp - H)))

        w_itemsize = jnp.dtype(self.matmul_dtype).itemsize
        cost = pl.CostEstimate(
            flops=2 * B * K * 4 * Hp,
            transcendentals=5 * B * Hp,
            bytes_accessed=int(B * K * w_itemsize          # xh
                               + K * 4 * Hp * w_itemsize   # fused weights
                               + 4 * Hp * 4                # bias
                               + B * Hp * 4                # cell state in
                               + 2 * B * Hp * 4))          # h / c out

        w_spec = _maybe_buffered_spec((None, K, 4 * tn), lambda j: (j, 0, 0),
                                      self.weight_bufs)
        b_spec = _maybe_buffered_spec((None, 1, 4 * tn), lambda j: (j, 0, 0),
                                      self.weight_bufs)

        h_pad, c_pad = pl.pallas_call(
            _lstm_cell_kernel,
            out_shape=(jax.ShapeDtypeStruct((B, Hp), self.dtype),
                       jax.ShapeDtypeStruct((B, Hp), self.dtype)),
            grid=(n_tiles,),
            in_specs=[pl.BlockSpec((B, K), lambda j: (0, 0)),
                      pl.BlockSpec((B, tn), lambda j: (0, j)),
                      w_spec, b_spec],
            out_specs=(pl.BlockSpec((B, tn), lambda j: (0, j)),
                       pl.BlockSpec((B, tn), lambda j: (0, j))),
            compiler_params=pltpu.CompilerParams(
                dimension_semantics=("parallel",),
                vmem_limit_bytes=self.vmem_limit_bytes),
            cost_estimate=cost,
        )(xh, c_in, self.w_blocks, self.b_blocks)

        h_out = h_pad[:, :H] if Hp != H else h_pad
        c_out = c_pad[:, :H] if Hp != H else c_pad

        if self.attach_fc:
            # PyTorch module returns only fc(h'); h'/c' are discarded.  The fc
            # projection is O(B*H) vs O(B*K*4H) for the gates, so it runs as a
            # plain jnp op -- keeping the hidden-tile grid axis "parallel"
            # (megacore sharding on v7x) for the dominant LSTM work.
            out = h_out.astype(jnp.float32) @ self.w_fc.T + self.b_fc
            return out.astype(self.dtype)
        return h_out, c_out


def _reference_lstm_cell(x, h, c, w_ih_t, w_hh_t, bias):
    """Pure-JAX reference with PyTorch nn.LSTMCell semantics.

    Uses the same reduced-precision matmul operands as the kernel (bf16 by
    default) so the comparison isolates kernel correctness.
    """
    H = h.shape[1]
    xh = jnp.concatenate([x, h], axis=-1).astype(w_ih_t.dtype)
    w = jnp.concatenate([w_ih_t, w_hh_t], axis=0)
    gates = jnp.dot(xh, w, preferred_element_type=jnp.float32) + bias
    i = jax.nn.sigmoid(gates[:, 0 * H:1 * H])
    f = jax.nn.sigmoid(gates[:, 1 * H:2 * H])
    g = jnp.tanh(gates[:, 2 * H:3 * H])
    o = jax.nn.sigmoid(gates[:, 3 * H:4 * H])
    c_new = f * c + i * g
    h_new = o * jnp.tanh(c_new)
    return h_new, c_new


if __name__ == "__main__":
    key = jax.random.PRNGKey(0)

    # ---- Case 1: small H (H < 128 exercises the lane-padding path) --------
    B, D, H = 8, 32, 32
    kx, kh, kc, kp = jax.random.split(key, 4)
    x = jax.random.normal(kx, (B, D), jnp.float32)
    h0 = jax.random.normal(kh, (B, H), jnp.float32)
    c0 = jax.random.normal(kc, (B, H), jnp.float32)

    cell = LstmCellPallas(input_dims=D, hidden_dims=H, attach_fc=False, key=kp)
    h1, c1 = cell(x, h0, c0)
    jax.block_until_ready((h1, c1))
    h_ref, c_ref = _reference_lstm_cell(x, h0, c0, cell.w_ih_t, cell.w_hh_t,
                                        cell.bias)
    assert h1.shape == (B, H) and c1.shape == (B, H)
    assert jnp.allclose(h1, h_ref, atol=2e-3, rtol=2e-3), "h mismatch"
    assert jnp.allclose(c1, c_ref, atol=2e-3, rtol=2e-3), "c mismatch"

    # ---- Case 2: attach_fc=True -> fc(h') of shape (B, 1) ------------------
    cell_fc = LstmCellPallas(input_dims=D, hidden_dims=H, attach_fc=True,
                             key=kp)
    out = cell_fc(x, h0, c0)
    jax.block_until_ready(out)
    h_ref2, _ = _reference_lstm_cell(x, h0, c0, cell_fc.w_ih_t, cell_fc.w_hh_t,
                                     cell_fc.bias)
    out_ref = h_ref2 @ cell_fc.w_fc.T + cell_fc.b_fc
    assert out.shape == (B, 1)
    assert jnp.allclose(out, out_ref, atol=2e-3, rtol=2e-3), "fc mismatch"

    # ---- Case 3: multi-tile grid, contiguous per-tile weight slabs, and ----
    # ---- (when available) Buffered(3) weight pipelining ---------------------
    B3, D3, H3 = 8, 64, 384
    kx3, kh3, kc3, kp3 = jax.random.split(jax.random.PRNGKey(1), 4)
    x3 = jax.random.normal(kx3, (B3, D3), jnp.float32)
    h3 = jax.random.normal(kh3, (B3, H3), jnp.float32)
    c3 = jax.random.normal(kc3, (B3, H3), jnp.float32)
    cell3 = LstmCellPallas(input_dims=D3, hidden_dims=H3, attach_fc=False,
                           key=kp3, max_tile=128)
    h4, c4 = cell3(x3, h3, c3)
    jax.block_until_ready((h4, c4))
    h_ref3, c_ref3 = _reference_lstm_cell(x3, h3, c3, cell3.w_ih_t,
                                          cell3.w_hh_t, cell3.bias)
    assert jnp.allclose(h4, h_ref3, atol=2e-3, rtol=2e-3), "h mismatch (tiled)"
    assert jnp.allclose(c4, c_ref3, atol=2e-3, rtol=2e-3), "c mismatch (tiled)"

    print("KERNEL_OK")
</pallas_src>

<mosaic_0001>
module attributes {stable_mosaic.version = 11 : i64} {
  func.func @_lstm_cell_kernel(%arg0: i32, %arg1: memref<8x64xbf16, #tpu.memory_space<vmem>>, %arg2: memref<8x128xf32, #tpu.memory_space<vmem>>, %arg3: memref<1x64x512xbf16, #tpu.memory_space<vmem>>, %arg4: memref<1x1x512xf32, #tpu.memory_space<vmem>>, %arg5: memref<8x128xf32, #tpu.memory_space<vmem>>, %arg6: memref<8x128xf32, #tpu.memory_space<vmem>>) attributes {dimension_semantics = [#tpu.dimension_semantics<parallel>], iteration_bounds = array<i64: 1>, scalar_prefetch = 0 : i64, scratch_operands = 0 : i64, tpu.core_type = #tpu.core_type<tc>, window_params = [{pipeline_mode = #tpu.pipeline_mode<synchronous>, transform_indices = @transform_0, window_bounds = array<i64: 8, 64>}, {transform_indices = @transform_1, window_bounds = array<i64: 8, 128>}, {transform_indices = @transform_2, window_bounds = array<i64: 1, 64, 512>}, {transform_indices = @transform_3, window_bounds = array<i64: 1, 1, 512>}, {transform_indices = @transform_4, window_bounds = array<i64: 8, 128>}, {transform_indices = @transform_5, window_bounds = array<i64: 8, 128>}]} {
    %c0 = arith.constant 0 : index
    %c0_0 = arith.constant 0 : index
    %0 = vector.load %arg1[%c0, %c0_0] : memref<8x64xbf16, #tpu.memory_space<vmem>>, vector<8x64xbf16>
    %c0_1 = arith.constant 0 : index
    %c0_2 = arith.constant 0 : index
    %c0_3 = arith.constant 0 : index
    %1 = vector.load %arg3[%c0_1, %c0_2, %c0_3] : memref<1x64x512xbf16, #tpu.memory_space<vmem>>, vector<1x64x512xbf16>
    %2 = vector.shape_cast %1 : vector<1x64x512xbf16> to vector<64x512xbf16>
    %cst = arith.constant dense<0.000000e+00> : vector<8x512xf32>
    %3 = tpu.matmul %0, %2, %cst {dimension_numbers = #tpu.dot_dimension_numbers<[1], [0], [0], [1], [0, 0, 1, 1], [], []>} : vector<8x64xbf16>, vector<64x512xbf16>, vector<8x512xf32> -> vector<8x512xf32>
    %c0_4 = arith.constant 0 : index
    %c0_5 = arith.constant 0 : index
    %c0_6 = arith.constant 0 : index
    %4 = vector.load %arg4[%c0_4, %c0_5, %c0_6] : memref<1x1x512xf32, #tpu.memory_space<vmem>>, vector<1x1x512xf32>
    %5 = vector.shape_cast %4 : vector<1x1x512xf32> to vector<1x512xf32>
    %6 = vector.broadcast %5 : vector<1x512xf32> to vector<8x512xf32>
    %7 = arith.addf %3, %6 : vector<8x512xf32>
    %8 = vector.extract_strided_slice %7 {offsets = [0, 0], sizes = [8, 128], strides = [1, 1]} : vector<8x512xf32> to vector<8x128xf32>
    %cst_7 = arith.constant 5.000000e-01 : f32
    %9 = vector.broadcast %cst_7 : f32 to vector<8x128xf32>
    %10 = arith.mulf %9, %8 : vector<8x128xf32>
    %11 = math.tanh %10 : vector<8x128xf32>
    %cst_8 = arith.constant 1.000000e+00 : f32
    %12 = vector.broadcast %cst_8 : f32 to vector<8x128xf32>
    %13 = arith.addf %12, %11 : vector<8x128xf32>
    %cst_9 = arith.constant 5.000000e-01 : f32
    %14 = vector.broadcast %cst_9 : f32 to vector<8x128xf32>
    %15 = arith.mulf %14, %13 : vector<8x128xf32>
    %16 = vector.extract_strided_slice %7 {offsets = [0, 128], sizes = [8, 128], strides = [1, 1]} : vector<8x512xf32> to vector<8x128xf32>
    %cst_10 = arith.constant 5.000000e-01 : f32
    %17 = vector.broadcast %cst_10 : f32 to vector<8x128xf32>
    %18 = arith.mulf %17, %16 : vector<8x128xf32>
    %19 = math.tanh %18 : vector<8x128xf32>
    %cst_11 = arith.constant 1.000000e+00 : f32
    %20 = vector.broadcast %cst_11 : f32 to vector<8x128xf32>
    %21 = arith.addf %20, %19 : vector<8x128xf32>
    %cst_12 = arith.constant 5.000000e-01 : f32
    %22 = vector.broadcast %cst_12 : f32 to vector<8x128xf32>
    %23 = arith.mulf %22, %21 : vector<8x128xf32>
    %24 = vector.extract_strided_slice %7 {offsets = [0, 256], sizes = [8, 128], strides = [1, 1]} : vector<8x512xf32> to vector<8x128xf32>
    %25 = math.tanh %24 : vector<8x128xf32>
    %26 = vector.extract_strided_slice %7 {offsets = [0, 384], sizes = [8, 128], strides = [1, 1]} : vector<8x512xf32> to vector<8x128xf32>
    %cst_13 = arith.constant 5.000000e-01 : f32
    %27 = vector.broadcast %cst_13 : f32 to vector<8x128xf32>
    %28 = arith.mulf %27, %26 : vector<8x128xf32>
    %29 = math.tanh %28 : vector<8x128xf32>
    %cst_14 = arith.constant 1.000000e+00 : f32
    %30 = vector.broadcast %cst_14 : f32 to vector<8x128xf32>
    %31 = arith.addf %30, %29 : vector<8x128xf32>
    %cst_15 = arith.constant 5.000000e-01 : f32
    %32 = vector.broadcast %cst_15 : f32 to vector<8x128xf32>
    %33 = arith.mulf %32, %31 : vector<8x128xf32>
    %c0_16 = arith.constant 0 : index
    %c0_17 = arith.constant 0 : index
    %34 = vector.load %arg2[%c0_16, %c0_17] : memref<8x128xf32, #tpu.memory_space<vmem>>, vector<8x128xf32>
    %35 = arith.mulf %23, %34 : vector<8x128xf32>
    %36 = arith.mulf %15, %25 : vector<8x128xf32>
    %37 = arith.addf %35, %36 : vector<8x128xf32>
    %38 = math.tanh %37 : vector<8x128xf32>
    %39 = arith.mulf %33, %38 : vector<8x128xf32>
    %c0_18 = arith.constant 0 : index
    %c0_19 = arith.constant 0 : index
    %40 = vector.load %arg5[%c0_18, %c0_19] : memref<8x128xf32, #tpu.memory_space<vmem>>, vector<8x128xf32>
    tpu.vector_store %arg5[%c0_18, %c0_19], %39 {strides = array<i32>} : memref<8x128xf32, #tpu.memory_space<vmem>>, vector<8x128xf32>,
    %c0_20 = arith.constant 0 : index
    %c0_21 = arith.constant 0 : index
    %41 = vector.load %arg6[%c0_20, %c0_21] : memref<8x128xf32, #tpu.memory_space<vmem>>, vector<8x128xf32>
    tpu.vector_store %arg6[%c0_20, %c0_21], %37 {strides = array<i32>} : memref<8x128xf32, #tpu.memory_space<vmem>>, vector<8x128xf32>,
    return
  }
  func.func @transform_0(%arg0: i32) -> (i32, i32) {
    %c0_i32 = arith.constant 0 : i32
    %c0_i32_0 = arith.constant 0 : i32
    %c0_i32_1 = arith.constant 0 : i32
    return %c0_i32, %c0_i32_0 : i32, i32
  }
  func.func @transform_1(%arg0: i32) -> (i32, i32) {
    %c0_i32 = arith.constant 0 : i32
    %c0_i32_0 = arith.constant 0 : i32
    return %c0_i32, %arg0 : i32, i32
  }
  func.func @transform_2(%arg0: i32) -> (i32, i32, i32) {
    %c0_i32 = arith.constant 0 : i32
    %c0_i32_0 = arith.constant 0 : i32
    %c0_i32_1 = arith.constant 0 : i32
    return %arg0, %c0_i32, %c0_i32_0 : i32, i32, i32
  }
  func.func @transform_3(%arg0: i32) -> (i32, i32, i32) {
    %c0_i32 = arith.constant 0 : i32
    %c0_i32_0 = arith.constant 0 : i32
    %c0_i32_1 = arith.constant 0 : i32
    return %arg0, %c0_i32, %c0_i32_0 : i32, i32, i32
  }
  func.func @transform_4(%arg0: i32) -> (i32, i32) {
    %c0_i32 = arith.constant 0 : i32
    %c0_i32_0 = arith.constant 0 : i32
    return %c0_i32, %arg0 : i32, i32
  }
  func.func @transform_5(%arg0: i32) -> (i32, i32) {
    %c0_i32 = arith.constant 0 : i32
    %c0_i32_0 = arith.constant 0 : i32
    return %c0_i32, %arg0 : i32, i32
  }
}

</mosaic_0001>

<llo_original>
// kernel: a_call__.1
$region0: #{a_call__.1}
  #allocation0 [shape = 'u32[]', space=smem, size = 0x4, offset = 0x4, fixed_abs, tag = 'smem constant byte address 0x4 - core index']
  #allocation1 [shape = 'u32[144,128]{1,0:T(1,128)}', space=vmem, size = 0x12000, scoped, tag = 'internal scratch']
  %s0 = inlined_call_operand.vmem [shape: bf16[8,64], index: 0, kind: input, shape index: {}]
  %s1 = inlined_call_operand.vmem [shape: f32[8,128], index: 1, kind: input, shape index: {}]
  %s2 = inlined_call_operand.hbm [shape: bf16[1,64,512], index: 2, kind: input, shape index: {}]
  %s3 = inlined_call_operand.vmem [shape: f32[1,1,512], index: 3, kind: input, shape index: {}]
  %s4 = inlined_call_operand.hbm [shape: f32[8,128], index: 4, kind: output, shape index: {0}]
  %s5 = inlined_call_operand.hbm [shape: f32[8,128], index: 5, kind: output, shape index: {1}]
  %6 = xla_tuple %s4, %s5
  %s7 = sld [smem:[#allocation0]]
  $region38: #{a_call__.1} parent=0
    _
  %s9 = ssub.s32 1, %s7
  %s10 = scalar_select 0, %s9, %s7
  $region1: #{a_call__.1} parent=0
    #allocation2 [shape = 'u8[65536]{0}', space=vmem, size = 0x10000, scoped, tag = 'input window, operand 2, single buffered']
    #allocation3 [shape = 's32[1]{0}', space=sflag, size = 0x4, scoped, tag = 'scoped memory for a_call__.1']
    #allocation4 [shape = 's32[1]{0}', space=sflag, size = 0x4, scoped, tag = 'scoped memory for a_call__.1']
    #allocation5 [shape = 'u8[4096]{0}', space=vmem, size = 0x1000, scoped, tag = 'output window, operand 0, single buffered']
    #allocation6 [shape = 'u8[4096]{0}', space=vmem, size = 0x1000, scoped, tag = 'output window, operand 1, single buffered']
    #allocation7 [shape = 's32[1]{0}', space=sflag, size = 0x4, scoped, tag = 'scoped memory for a_call__.1']
    %11 = vsyncpa [#allocation3], 0
    %12 = vsyncpa [#allocation4], 0
    %13 = vsyncpa [#allocation7], 0
    // Predicated region
    $region2: #{a_call__.1} parent=1 // pred_check
      _
    $region3: #{a_call__.1} parent=1 // pred_check_branch
      %15 = sbr.rel (0) target = $region5
    $region4: #{a_call__.1} parent=1 // pred_region
      _
    $region5: #{a_call__.1} parent=1 // pred_fallthru
      _
    // Predicated region
    $region6: #{a_call__.1} parent=1 // pred_check
      _
    $region7: #{a_call__.1} parent=1 // pred_check_branch
      %17 = sbr.rel (0) target = $region9
    $region8: #{a_call__.1} parent=1 // pred_region
      _
    $region9: #{a_call__.1} parent=1 // pred_fallthru
      _
    // Predicated region
    $region10: #{a_call__.1} parent=1 // pred_check
      _
    $region11: #{a_call__.1} parent=1 // pred_check_branch
      %19 = sbr.rel (0) target = $region13
    $region12: #{a_call__.1} parent=1 // pred_region
      %s21 = ssub.s32 2048, 2048
      %22 = vsyncadd [#allocation3], %s21
      %s23 = sshll.u32 [#allocation2], 4
      %s24 = int_to_ptr.vmem [resolvable:$true] %s23
      %29 = dma.hbm_to_vmem [thread:$0]  %s2, 2048, %s24, [#allocation3], 256, 256, 16
    $region13: #{a_call__.1} parent=1 // pred_fallthru
      _
    // Predicated region
    $region14: #{a_call__.1} parent=1 // pred_check
      _
    $region15: #{a_call__.1} parent=1 // pred_check_branch
      %31 = sbr.rel (0) target = $region17
    $region16: #{a_call__.1} parent=1 // pred_region
      _
    $region17: #{a_call__.1} parent=1 // pred_fallthru
      _
    // Predicated region
    $region18: #{a_call__.1} parent=1 // pred_check
      _
    $region19: #{a_call__.1} parent=1 // pred_check_branch
      %33 = sbr.rel (0) target = $region21
    $region20: #{a_call__.1} parent=1 // pred_region
      %34 = dma.done [#allocation3], 2048
    $region21: #{a_call__.1} parent=1 // pred_fallthru
      _
    %v36 = vld [vmem:[%s0] sm:$0xf]
    %v37 = vld [vmem:[#allocation2] sm:$0xff]
    %v38 = vld [vmem:[#allocation2 + $0x8] sm:$0xff]
    %v39 = vld [vmem:[#allocation2 + $0x10] sm:$0xff]
    %v40 = vld [vmem:[#allocation2 + $0x18] sm:$0xff]
    %v41 = vld [vmem:[#allocation2 + $0x20] sm:$0xff]
    %v42 = vld [vmem:[#allocation2 + $0x28] sm:$0xff]
    %v43 = vld [vmem:[#allocation2 + $0x30] sm:$0xff]
    %v44 = vld [vmem:[#allocation2 + $0x38] sm:$0xff]
    %v45 = vld [vmem:[#allocation2 + $0x40] sm:$0xff]
    %v46 = vld [vmem:[#allocation2 + $0x48] sm:$0xff]
    %v47 = vld [vmem:[#allocation2 + $0x50] sm:$0xff]
    %v48 = vld [vmem:[#allocation2 + $0x58] sm:$0xff]
    %v49 = vld [vmem:[#allocation2 + $0x60] sm:$0xff]
    %v50 = vld [vmem:[#allocation2 + $0x68] sm:$0xff]
    %v51 = vld [vmem:[#allocation2 + $0x70] sm:$0xff]
    %v52 = vld [vmem:[#allocation2 + $0x78] sm:$0xff]
    %v53 = vld [vmem:[%s3] sm:$0xf]
    %v55 = vlaneseq
    %v56 = vshrl.u32 %v55, 7
    %v57 = vsub.s32 0, %v56
    %v58 = vrot.slane %v53, %v57
    %v59 = vlaneseq
    %v60 = vshrl.u32 %v59, 7
    %v61 = vsub.s32 1, %v60
    %v62 = vrot.slane %v53, %v61
    %v63 = vlaneseq
    %v64 = vshrl.u32 %v63, 7
    %v65 = vsub.s32 2, %v64
    %v66 = vrot.slane %v53, %v65
    %v67 = vlaneseq
    %v68 = vshrl.u32 %v67, 7
    %v69 = vsub.s32 3, %v68
    %v70 = vrot.slane %v53, %v69
    %v91 = vunpack.c.l.b16 %v37
    %v92 = vunpack.c.h.b16 %v37
    %v93 = vunpack.c.l.b16 %v38
    %v94 = vunpack.c.h.b16 %v38
    %v95 = vunpack.c.l.b16 %v39
    %v96 = vunpack.c.h.b16 %v39
    %v97 = vunpack.c.l.b16 %v40
    %v98 = vunpack.c.h.b16 %v40
    %v99 = vunpack.c.l.b16 %v41
    %v100 = vunpack.c.h.b16 %v41
    %v101 = vunpack.c.l.b16 %v42
    %v102 = vunpack.c.h.b16 %v42
    %v103 = vunpack.c.l.b16 %v43
    %v104 = vunpack.c.h.b16 %v43
    %v105 = vunpack.c.l.b16 %v44
    %v106 = vunpack.c.h.b16 %v44
    %v107 = vunpack.c.l.b16 %v45
    %v108 = vunpack.c.h.b16 %v45
    %v109 = vunpack.c.l.b16 %v46
    %v110 = vunpack.c.h.b16 %v46
    %v111 = vunpack.c.l.b16 %v47
    %v112 = vunpack.c.h.b16 %v47
    %v113 = vunpack.c.l.b16 %v48
    %v114 = vunpack.c.h.b16 %v48
    %v115 = vunpack.c.l.b16 %v49
    %v116 = vunpack.c.h.b16 %v49
    %v117 = vunpack.c.l.b16 %v50
    %v118 = vunpack.c.h.b16 %v50
    %v119 = vunpack.c.l.b16 %v51
    %v120 = vunpack.c.h.b16 %v51
    %v121 = vunpack.c.l.b16 %v52
    %v122 = vunpack.c.h.b16 %v52
    %v123 = vpack.c.b16 %v95, %v91
    %v124 = vpack.c.b16 %v96, %v92
    %v125 = vpack.c.b16 %v97, %v93
    %v126 = vpack.c.b16 %v98, %v94
    %v127 = vpack.c.b16 %v103, %v99
    %v128 = vpack.c.b16 %v104, %v100
    %v129 = vpack.c.b16 %v105, %v101
    %v130 = vpack.c.b16 %v106, %v102
    %v131 = vpack.c.b16 %v111, %v107
    %v132 = vpack.c.b16 %v112, %v108
    %v133 = vpack.c.b16 %v113, %v109
    %v134 = vpack.c.b16 %v114, %v110
    %v135 = vpack.c.b16 %v119, %v115
    %v136 = vpack.c.b16 %v120, %v116
    %v137 = vpack.c.b16 %v121, %v117
    %v138 = vpack.c.b16 %v122, %v118
    %vm155 = vcmask 523264
    %v157 = vsel %vm155, %v36, 0
    %159 = vmatprep.subr.bf16.mxu0 0
    %160 = vmatpush1.bf16.msra.mxu0 0
    %161 = vmatprep.subr.bf16.mxu0 0
    %162 = vmatpush1.bf16.msra.mxu0 0
    %163 = vmatprep.subr.bf16.mxu0 0
    %164 = vmatpush1.bf16.msra.mxu0 0
    %165 = vmatprep.subr.bf16.mxu0 0
    %166 = vmatpush1.bf16.msra.mxu0 0
    %167 = vmatprep.subr.bf16.mxu0 %v136
    %168 = vmatpush1.bf16.msra.mxu0 %v135
    %169 = vmatprep.subr.bf16.mxu0 %v132
    %170 = vmatpush1.bf16.msra.mxu0 %v131
    %171 = vmatprep.subr.bf16.mxu0 %v128
    %172 = vmatpush1.bf16.msra.mxu0 %v127
    %173 = vmatprep.subr.bf16.mxu0 %v124
    %174 = vmatpush1.bf16.msra.mxu0 %v123
    %175 = vmatprep.subr.bf16.mxu0 0
    %176 = vmatpush2.bf16.msra.mxu0 0
    %177 = vmatprep.subr.bf16.mxu0 0
    %178 = vmatpush2.bf16.msra.mxu0 0
    %179 = vmatprep.subr.bf16.mxu0 0
    %180 = vmatpush2.bf16.msra.mxu0 0
    %181 = vmatprep.subr.bf16.mxu0 0
    %182 = vmatpush2.bf16.msra.mxu0 0
    %183 = vmatprep.subr.bf16.mxu0 0
    %184 = vmatpush2.bf16.msra.mxu0 0
    %185 = vmatprep.subr.bf16.mxu0 0
    %186 = vmatpush2.bf16.msra.mxu0 0
    %187 = vmatprep.subr.bf16.mxu0 0
    %188 = vmatpush2.bf16.msra.mxu0 0
    %189 = vmatprep.subr.bf16.mxu0 0
    %190 = vmatpush2.bf16.msra.mxu0 0
    %191 = vmatprep.mubr.bf16.mxu0 0
    %192 = vmatmul.mubr.bf16.gmra.mxu0 %v157
    %v193 = vpop.f32.mrf.mxu0
    %v194 = vadd.f32 %v58, %v193
    %v195 = vpop.f32.mrf.mxu0
    %v196 = vadd.f32 %v62, %v195
    %v197 = vpop.f32.mrf.mxu0
    %v198 = vpop.f32.mrf.mxu0
    %199 = vdwg.mxu0
    %200 = vmatprep.subr.bf16.mxu0 0
    %201 = vmatpush1.bf16.msra.mxu0 0
    %202 = vmatprep.subr.bf16.mxu0 0
    %203 = vmatpush1.bf16.msra.mxu0 0
    %204 = vmatprep.subr.bf16.mxu0 0
    %205 = vmatpush1.bf16.msra.mxu0 0
    %206 = vmatprep.subr.bf16.mxu0 0
    %207 = vmatpush1.bf16.msra.mxu0 0
    %208 = vmatprep.subr.bf16.mxu0 %v138
    %209 = vmatpush1.bf16.msra.mxu0 %v137
    %210 = vmatprep.subr.bf16.mxu0 %v134
    %211 = vmatpush1.bf16.msra.mxu0 %v133
    %212 = vmatprep.subr.bf16.mxu0 %v130
    %213 = vmatpush1.bf16.msra.mxu0 %v129
    %214 = vmatprep.subr.bf16.mxu0 %v126
    %215 = vmatpush1.bf16.msra.mxu0 %v125
    %216 = vmatprep.subr.bf16.mxu0 0
    %217 = vmatpush2.bf16.msra.mxu0 0
    %218 = vmatprep.subr.bf16.mxu0 0
    %219 = vmatpush2.bf16.msra.mxu0 0
    %220 = vmatprep.subr.bf16.mxu0 0
    %221 = vmatpush2.bf16.msra.mxu0 0
    %222 = vmatprep.subr.bf16.mxu0 0
    %223 = vmatpush2.bf16.msra.mxu0 0
    %224 = vmatprep.subr.bf16.mxu0 0
    %225 = vmatpush2.bf16.msra.mxu0 0
    %226 = vmatprep.subr.bf16.mxu0 0
    %227 = vmatpush2.bf16.msra.mxu0 0
    %228 = vmatprep.subr.bf16.mxu0 0
    %229 = vmatpush2.bf16.msra.mxu0 0
    %230 = vmatprep.subr.bf16.mxu0 0
    %231 = vmatpush2.bf16.msra.mxu0 0
    %232 = vmatprep.mubr.bf16.mxu0 0
    %233 = vmatmul.mubr.bf16.gmra.mxu0 %v157
    %v234 = vpop.f32.mrf.mxu0
    %v235 = vadd.f32 %v66, %v234
    %v236 = vpop.f32.mrf.mxu0
    %v237 = vadd.f32 %v70, %v236
    %v238 = vpop.f32.mrf.mxu0
    %v239 = vpop.f32.mrf.mxu0
    %240 = vdwg.mxu0
    %v241 = vmul.f32 %v194, 0.5
    %v242 = vtanh.pop %v241
    %v243 = vadd.f32 %v242, 1.0
    %v244 = vmul.f32 %v243, 0.5
    %v245 = vmul.f32 %v196, 0.5
    %v246 = vtanh.pop %v245
    %v247 = vadd.f32 %v246, 1.0
    %v248 = vmul.f32 %v247, 0.5
    %v249 = vtanh.pop %v235
    %v250 = vmul.f32 %v237, 0.5
    %v251 = vtanh.pop %v250
    %v252 = vadd.f32 %v251, 1.0
    %v253 = vmul.f32 %v252, 0.5
    %v254 = vld [vmem:[%s1] sm:$0xff]
    %v255 = vmul.f32 %v248, %v254
    %v256 = vmul.f32 %v244, %v249
    %v257 = vadd.f32 %v255, %v256
    %v258 = vtanh.pop %v257
    %v259 = vmul.f32 %v253, %v258
    %260 = vst [vmem:[#allocation5] sm:$0xff] %v259
    %261 = vst [vmem:[#allocation6] sm:$0xff] %v257
    // Predicated region
    $region22: #{a_call__.1} parent=1 // pred_check
      _
    $region23: #{a_call__.1} parent=1 // pred_check_branch
      %263 = sbr.rel (0) target = $region25
    $region24: #{a_call__.1} parent=1 // pred_region
      %s265 = ssub.s32 128, 128
      %266 = vsyncadd [#allocation4], %s265
      %s268 = sshll.u32 [#allocation5], 4
      %s269 = int_to_ptr.vmem [resolvable:$true] %s268
      %271 = dma.vmem_to_hbm [thread:$0]  %s269, 128, %s4, [#allocation4]
    $region25: #{a_call__.1} parent=1 // pred_fallthru
      _
    // Predicated region
    $region26: #{a_call__.1} parent=1 // pred_check
      _
    $region27: #{a_call__.1} parent=1 // pred_check_branch
      %273 = sbr.rel (0) target = $region29
    $region28: #{a_call__.1} parent=1 // pred_region
      %s275 = ssub.s32 128, 128
      %276 = vsyncadd [#allocation7], %s275
      %s278 = sshll.u32 [#allocation6], 4
      %s279 = int_to_ptr.vmem [resolvable:$true] %s278
      %281 = dma.vmem_to_hbm [thread:$0]  %s279, 128, %s5, [#allocation7]
    $region29: #{a_call__.1} parent=1 // pred_fallthru
      _
    // Predicated region
    $region30: #{a_call__.1} parent=1 // pred_check
      _
    $region31: #{a_call__.1} parent=1 // pred_check_branch
      %283 = sbr.rel (0) target = $region33
    $region32: #{a_call__.1} parent=1 // pred_region
      %284 = dma.done [#allocation4], 128
    $region33: #{a_call__.1} parent=1 // pred_fallthru
      _
    // Predicated region
    $region34: #{a_call__.1} parent=1 // pred_check
      _
    $region35: #{a_call__.1} parent=1 // pred_check_branch
      %286 = sbr.rel (0) target = $region37
    $region36: #{a_call__.1} parent=1 // pred_region
      %287 = dma.done [#allocation7], 128
    $region37: #{a_call__.1} parent=1 // pred_fallthru
      _
    %288 = vsyncpa [#allocation3], 1
    %289 = vsyncpa [#allocation4], 1
    %290 = vsyncpa [#allocation7], 1

</llo_original>
